<compile_context>
chip_gen: v5e
topology: v5e:2x2
jax: 0.10.0
libtpu: 0.0.40
codegen_flags: <defaults>
</compile_context>

<pallas_src>
import functools

import jax
import jax.numpy as jnp
from jax import lax
from jax.experimental import pallas as pl
from jax.experimental.pallas import tpu as pltpu

LANES = 128
DEFAULT_MAX_BLOCK_ROWS = 8192   # (8192, 128) f32 = 4 MiB per input per pipeline buffer
DEFAULT_SUB_ROWS = 256          # inner-chunk rows; bounds live elementwise temporaries
VMEM_LIMIT_BYTES = 32 * 1024 * 1024


def _combined_loss_kernel(scales_ref, nfo_ref, pred_ref, targ_ref, out_ref,
                          sse_acc, bce_acc, *, block_rows, sub_rows, num_sub,
                          blocks_per_core):
    c = pl.program_id(0)            # core split (parallel axis)
    i = pl.program_id(1)            # reduction step (arbitrary axis)

    @pl.when(i == 0)
    def _init():
        sse_acc[...] = jnp.zeros_like(sse_acc)
        bce_acc[...] = jnp.zeros_like(bce_acc)

    # Logical (unclamped) block id handled by this step; all arithmetic is in
    # block/row units, so it never overflows int32 even for huge tensors.
    b = c * blocks_per_core + i
    last = nfo_ref[0]               # index of the last block holding valid rows
    rows_last = nfo_ref[1]          # number of valid rows inside that block
    valid_rows = jnp.where(b < last, block_rows,
                           jnp.where(b == last, rows_last, 0))

    def _chunk(j):
        r0 = pl.multiple_of(j * sub_rows, sub_rows)
        p = pred_ref[pl.ds(r0, sub_rows), :].astype(jnp.float32)
        t = targ_ref[pl.ds(r0, sub_rows), :].astype(jnp.float32)
        d = p - t
        # PyTorch BCELoss clamps each log term at -100.  The BCE sum is
        # accumulated *un-negated*; the sign is folded into the final scale.
        log_p = jnp.maximum(jnp.log(p), -100.0)
        log_1mp = jnp.maximum(jnp.log(1.0 - p), -100.0)
        nll = t * log_p + (1.0 - t) * log_1mp
        return d * d, nll

    @pl.when(valid_rows == block_rows)          # fast path: fully valid block
    def _full_block():
        def body(j, carry):
            sq, nll = _chunk(j)
            sse_acc[...] += sq
            bce_acc[...] += nll
            return carry
        lax.fori_loop(0, num_sub, body, 0)

    # Ragged tail block: only row-granular masking is needed (valid data
    # always ends on a 128-lane row boundary).  Fully out-of-range clamped
    # blocks (valid_rows == 0) skip compute entirely.
    @pl.when(jnp.logical_and(valid_rows > 0, valid_rows < block_rows))
    def _tail_block():
        row_id = lax.broadcasted_iota(jnp.int32, (sub_rows, LANES), 0)

        def body(j, carry):
            sq, nll = _chunk(j)
            m = row_id < (valid_rows - j * sub_rows)
            sse_acc[...] += jnp.where(m, sq, 0.0)
            bce_acc[...] += jnp.where(m, nll, 0.0)
            return carry
        lax.fori_loop(0, num_sub, body, 0)

    @pl.when(i == pl.num_programs(1) - 1)
    def _finalize():
        sse = jnp.sum(sse_acc[...])             # single cross-lane reduce
        bce = jnp.sum(bce_acc[...])
        loss = scales_ref[0] * sse + scales_ref[1] * bce
        out_ref[...] = jnp.reshape(loss, (1, 1, 1))


def _detect_num_cores():
    """2 on v7x (2 TensorCores/chip), 1 on single-TC v5e/v6e."""
    try:
        kind = jax.devices()[0].device_kind.lower()
    except Exception:
        return 1
    return 2 if ("v7" in kind or "7x" in kind) else 1


def _partial_sums(p, t):
    """Un-scaled SSE and (un-negated) BCE sums of a small jnp slice."""
    p = p.astype(jnp.float32)
    t = t.astype(jnp.float32)
    sq = jnp.sum((p - t) ** 2)
    log_p = jnp.maximum(jnp.log(p), -100.0)
    log_1mp = jnp.maximum(jnp.log(1.0 - p), -100.0)
    nll = jnp.sum(t * log_p + (1.0 - t) * log_1mp)
    return sq, nll


def combined_loss(predictions, targets, alpha, beta, *,
                  max_block_rows=DEFAULT_MAX_BLOCK_ROWS,
                  sub_rows=DEFAULT_SUB_ROWS,
                  num_cores=None):
    """alpha * MSE(pred, targ) + beta * BCE(pred, targ), mean reduction."""
    assert predictions.shape == targets.shape
    n = int(predictions.size)
    assert n > 0

    p_flat = jnp.ravel(predictions)             # bitcast view of the NCHW tensor
    t_flat = jnp.ravel(targets)

    inv_n = 1.0 / float(n)
    scale_a = jnp.asarray(alpha, jnp.float32) * inv_n      # +alpha / n
    scale_b = -jnp.asarray(beta, jnp.float32) * inv_n      # -beta  / n (BCE sign)

    n_al = (n // LANES) * LANES
    rem = n - n_al

    total = jnp.zeros((), jnp.float32)
    if rem:  # <=127 leftover elements handled with plain jnp (negligible cost)
        sq_r, nll_r = _partial_sums(p_flat[n_al:], t_flat[n_al:])
        total = scale_a * sq_r + scale_b * nll_r
    if n_al == 0:                               # whole tensor fits in the remainder
        return total

    if rem:
        p2d = p_flat[:n_al].reshape(-1, LANES)  # 128-aligned prefix
        t2d = t_flat[:n_al].reshape(-1, LANES)
    else:
        p2d = p_flat.reshape(-1, LANES)         # pure bitcast, zero extra traffic
        t2d = t_flat.reshape(-1, LANES)
    rows = n_al // LANES

    # Block / inner-chunk geometry (block is always a multiple of the chunk
    # and never larger than the array).
    if rows < sub_rows:
        block_rows = rows
        sub = rows
    else:
        block_rows = min(max_block_rows, (rows // sub_rows) * sub_rows)
        sub = sub_rows
    num_sub = block_rows // sub

    grid_blocks = -(-rows // block_rows)
    nc = num_cores if num_cores is not None else _detect_num_cores()
    nc = max(1, min(nc, grid_blocks))
    bpc = -(-grid_blocks // nc)

    last_block = (rows - 1) // block_rows
    rows_last = rows - last_block * block_rows
    nfo = jnp.array([last_block, rows_last], jnp.int32)
    scales = jnp.stack([scale_a, scale_b]).astype(jnp.float32)

    kernel = functools.partial(
        _combined_loss_kernel, block_rows=block_rows, sub_rows=sub,
        num_sub=num_sub, blocks_per_core=bpc)

    def data_map(c, i):
        # Clamp so the DMA window stays in bounds; logically out-of-range
        # blocks contribute nothing (valid_rows == 0 inside the kernel).
        return (jnp.minimum(c * bpc + i, grid_blocks - 1), 0)

    partials = pl.pallas_call(
        kernel,
        out_shape=jax.ShapeDtypeStruct((nc, 1, 1), jnp.float32),
        grid_spec=pltpu.PrefetchScalarGridSpec(
            num_scalar_prefetch=0,
            grid=(nc, bpc),
            in_specs=[
                pl.BlockSpec(memory_space=pltpu.MemorySpace.SMEM),   # scales
                pl.BlockSpec(memory_space=pltpu.MemorySpace.SMEM),   # tail info
                pl.BlockSpec((block_rows, LANES), data_map),
                pl.BlockSpec((block_rows, LANES), data_map),
            ],
            out_specs=pl.BlockSpec((1, 1, 1), lambda c, i: (c, 0, 0)),
            scratch_shapes=[
                pltpu.VMEM((sub, LANES), jnp.float32),
                pltpu.VMEM((sub, LANES), jnp.float32),
            ],
        ),
        compiler_params=pltpu.CompilerParams(
            dimension_semantics=("parallel", "arbitrary"),
            vmem_limit_bytes=VMEM_LIMIT_BYTES,
        ),
    )(scales, nfo, p2d, t2d)

    # Per-core partials are already scaled by alpha/beta/n; just add them up.
    return total + jnp.sum(partials)


def _reference_combined_loss(p, t, alpha, beta):
    p = p.astype(jnp.float32)
    t = t.astype(jnp.float32)
    mse = jnp.mean((p - t) ** 2)
    log_p = jnp.maximum(jnp.log(p), -100.0)
    log_1mp = jnp.maximum(jnp.log(1.0 - p), -100.0)
    bce = jnp.mean(-(t * log_p + (1.0 - t) * log_1mp))
    return alpha * mse + beta * bce


if __name__ == "__main__":
    key = jax.random.PRNGKey(0)
    ks = jax.random.split(key, 6)
    alpha, beta = 0.7, 0.3

    def check(pred, targ, **kw):
        out = combined_loss(pred, targ, alpha, beta, **kw)
        jax.block_until_ready(out)
        ref = _reference_combined_loss(pred, targ, alpha, beta)
        assert jnp.allclose(out, ref, rtol=1e-5, atol=1e-5), (out, ref, kw)

    # 1) 128-aligned NCHW tensor: zero-copy bitcast path, single block.
    s1 = (2, 4, 16, 16)
    p1 = jax.random.uniform(ks[0], s1, jnp.float32, minval=0.01, maxval=0.99)
    t1 = jax.random.uniform(ks[1], s1, jnp.float32, minval=0.0, maxval=1.0)
    check(p1, t1)

    # 2) Ragged element count: aligned prefix in the kernel + <128-element
    #    remainder folded in by the wrapper (no jnp.pad of the inputs).
    s2 = (3, 5, 17, 19)
    p2 = jax.random.uniform(ks[2], s2, jnp.float32, minval=0.01, maxval=0.99)
    t2 = jax.random.uniform(ks[3], s2, jnp.float32, minval=0.0, maxval=1.0)
    check(p2, t2)

    # 3) Multi-block grid + row-masked tail block + >1 inner chunk per block
    #    (block/chunk sizes lowered so the real hot-loop paths run at small shapes).
    s3 = (2, 8, 36, 36)
    p3 = jax.random.uniform(ks[4], s3, jnp.float32, minval=0.01, maxval=0.99)
    t3 = jax.random.uniform(ks[5], s3, jnp.float32, minval=0.0, maxval=1.0)
    check(p3, t3, max_block_rows=64, sub_rows=32)

    # 4) Same data with a forced 2-way core split (exercises the clamped
    #    out-of-range block and per-core partial outputs; correct on 1 TC too).
    check(p3, t3, max_block_rows=64, sub_rows=32, num_cores=2)

    print("KERNEL_OK")
</pallas_src>

<mosaic_0001>
module attributes {stable_mosaic.version = 11 : i64} {
  func.func @_combined_loss_kernel(%arg0: i32, %arg1: i32, %arg2: memref<2xf32, #tpu.memory_space<smem>>, %arg3: memref<2xi32, #tpu.memory_space<smem>>, %arg4: memref<16x128xf32, #tpu.memory_space<vmem>>, %arg5: memref<16x128xf32, #tpu.memory_space<vmem>>, %arg6: memref<1x1x1xf32, #tpu.memory_space<vmem>>, %arg7: memref<16x128xf32, #tpu.memory_space<vmem>>, %arg8: memref<16x128xf32, #tpu.memory_space<vmem>>) attributes {dimension_semantics = [#tpu.dimension_semantics<parallel>, #tpu.dimension_semantics<arbitrary>], iteration_bounds = array<i64: 1, 1>, scalar_prefetch = 0 : i64, scratch_operands = 2 : i64, tpu.core_type = #tpu.core_type<tc>, window_params = [{transform_indices = @transform_0, window_bounds = array<i64: 2>}, {transform_indices = @transform_1, window_bounds = array<i64: 2>}, {transform_indices = @transform_2, window_bounds = array<i64: 16, 128>}, {transform_indices = @transform_3, window_bounds = array<i64: 16, 128>}, {transform_indices = @transform_4, window_bounds = array<i64: 1, 1, 1>}]} {
    %c0_i32 = arith.constant 0 : i32
    %0 = arith.cmpi eq, %arg1, %c0_i32 : i32
    %1 = arith.extui %0 : i1 to i32
    %c0_i32_0 = arith.constant 0 : i32
    %2 = arith.cmpi ne, %1, %c0_i32_0 : i32
    scf.if %2 {
      %cst = arith.constant 0.000000e+00 : f32
      %22 = vector.broadcast %cst : f32 to vector<16x128xf32>
      %c0_9 = arith.constant 0 : index
      %c0_10 = arith.constant 0 : index
      %23 = vector.load %arg7[%c0_9, %c0_10] : memref<16x128xf32, #tpu.memory_space<vmem>>, vector<16x128xf32>
      tpu.vector_store %arg7[%c0_9, %c0_10], %22 {strides = array<i32>} : memref<16x128xf32, #tpu.memory_space<vmem>>, vector<16x128xf32>,
      %cst_11 = arith.constant 0.000000e+00 : f32
      %24 = vector.broadcast %cst_11 : f32 to vector<16x128xf32>
      %c0_12 = arith.constant 0 : index
      %c0_13 = arith.constant 0 : index
      %25 = vector.load %arg8[%c0_12, %c0_13] : memref<16x128xf32, #tpu.memory_space<vmem>>, vector<16x128xf32>
      tpu.vector_store %arg8[%c0_12, %c0_13], %24 {strides = array<i32>} : memref<16x128xf32, #tpu.memory_space<vmem>>, vector<16x128xf32>,
    } else {
    }
    %c1_i32 = arith.constant 1 : i32
    %3 = arith.muli %arg0, %c1_i32 : i32
    %4 = arith.addi %3, %arg1 : i32
    %c0 = arith.constant 0 : index
    %5 = memref.load %arg3[%c0] : memref<2xi32, #tpu.memory_space<smem>>
    %c1 = arith.constant 1 : index
    %6 = memref.load %arg3[%c1] : memref<2xi32, #tpu.memory_space<smem>>
    %7 = arith.cmpi slt, %4, %5 : i32
    %8 = arith.cmpi eq, %4, %5 : i32
    %c0_i32_1 = arith.constant 0 : i32
    %9 = arith.select %8, %6, %c0_i32_1 : i32
    %c16_i32 = arith.constant 16 : i32
    %10 = arith.select %7, %c16_i32, %9 : i32
    %c16_i32_2 = arith.constant 16 : i32
    %11 = arith.cmpi eq, %10, %c16_i32_2 : i32
    %12 = arith.extui %11 : i1 to i32
    %c0_i32_3 = arith.constant 0 : i32
    %13 = arith.cmpi ne, %12, %c0_i32_3 : i32
    scf.if %13 {
      %c0_i32_9 = arith.constant 0 : i32
      %c16_i32_10 = arith.constant 16 : i32
      %22 = arith.muli %c0_i32_9, %c16_i32_10 : i32
      %23 = tpu.assume_multiple %22, 16 : i32
      %24 = arith.index_cast %23 : i32 to index
      %c0_11 = arith.constant 0 : index
      %25 = vector.load %arg4[%24, %c0_11] : memref<16x128xf32, #tpu.memory_space<vmem>>, vector<16x128xf32>
      %26 = arith.index_cast %23 : i32 to index
      %c0_12 = arith.constant 0 : index
      %27 = vector.load %arg5[%26, %c0_12] : memref<16x128xf32, #tpu.memory_space<vmem>>, vector<16x128xf32>
      %28 = arith.subf %25, %27 : vector<16x128xf32>
      %29 = math.log %25 : vector<16x128xf32>
      %cst = arith.constant -1.000000e+02 : f32
      %30 = vector.broadcast %cst : f32 to vector<16x128xf32>
      %31 = arith.maximumf %29, %30 : vector<16x128xf32>
      %cst_13 = arith.constant 1.000000e+00 : f32
      %32 = vector.broadcast %cst_13 : f32 to vector<16x128xf32>
      %33 = arith.subf %32, %25 : vector<16x128xf32>
      %34 = math.log %33 : vector<16x128xf32>
      %cst_14 = arith.constant -1.000000e+02 : f32
      %35 = vector.broadcast %cst_14 : f32 to vector<16x128xf32>
      %36 = arith.maximumf %34, %35 : vector<16x128xf32>
      %37 = arith.mulf %27, %31 : vector<16x128xf32>
      %cst_15 = arith.constant 1.000000e+00 : f32
      %38 = vector.broadcast %cst_15 : f32 to vector<16x128xf32>
      %39 = arith.subf %38, %27 : vector<16x128xf32>
      %40 = arith.mulf %39, %36 : vector<16x128xf32>
      %41 = arith.addf %37, %40 : vector<16x128xf32>
      %42 = arith.mulf %28, %28 : vector<16x128xf32>
      %c0_16 = arith.constant 0 : index
      %c0_17 = arith.constant 0 : index
      %43 = vector.load %arg7[%c0_16, %c0_17] : memref<16x128xf32, #tpu.memory_space<vmem>>, vector<16x128xf32>
      %44 = arith.addf %43, %42 : vector<16x128xf32>
      %c0_18 = arith.constant 0 : index
      %c0_19 = arith.constant 0 : index
      %45 = vector.load %arg7[%c0_18, %c0_19] : memref<16x128xf32, #tpu.memory_space<vmem>>, vector<16x128xf32>
      tpu.vector_store %arg7[%c0_18, %c0_19], %44 {strides = array<i32>} : memref<16x128xf32, #tpu.memory_space<vmem>>, vector<16x128xf32>,
      %c0_20 = arith.constant 0 : index
      %c0_21 = arith.constant 0 : index
      %46 = vector.load %arg8[%c0_20, %c0_21] : memref<16x128xf32, #tpu.memory_space<vmem>>, vector<16x128xf32>
      %47 = arith.addf %46, %41 : vector<16x128xf32>
      %c0_22 = arith.constant 0 : index
      %c0_23 = arith.constant 0 : index
      %48 = vector.load %arg8[%c0_22, %c0_23] : memref<16x128xf32, #tpu.memory_space<vmem>>, vector<16x128xf32>
      tpu.vector_store %arg8[%c0_22, %c0_23], %47 {strides = array<i32>} : memref<16x128xf32, #tpu.memory_space<vmem>>, vector<16x128xf32>,
      %c1_i32_24 = arith.constant 1 : i32
    } else {
    }
    %c0_i32_4 = arith.constant 0 : i32
    %14 = arith.cmpi sgt, %10, %c0_i32_4 : i32
    %c16_i32_5 = arith.constant 16 : i32
    %15 = arith.cmpi slt, %10, %c16_i32_5 : i32
    %16 = arith.andi %14, %15 : i1
    %17 = arith.extui %16 : i1 to i32
    %c0_i32_6 = arith.constant 0 : i32
    %18 = arith.cmpi ne, %17, %c0_i32_6 : i32
    scf.if %18 {
      %22 = tpu.iota {dimensions = array<i32: 0>} : vector<16x128xi32>
      %c0_i32_9 = arith.constant 0 : i32
      %c16_i32_10 = arith.constant 16 : i32
      %23 = arith.muli %c0_i32_9, %c16_i32_10 : i32
      %24 = tpu.assume_multiple %23, 16 : i32
      %25 = arith.index_cast %24 : i32 to index
      %c0_11 = arith.constant 0 : index
      %26 = vector.load %arg4[%25, %c0_11] : memref<16x128xf32, #tpu.memory_space<vmem>>, vector<16x128xf32>
      %27 = arith.index_cast %24 : i32 to index
      %c0_12 = arith.constant 0 : index
      %28 = vector.load %arg5[%27, %c0_12] : memref<16x128xf32, #tpu.memory_space<vmem>>, vector<16x128xf32>
      %29 = arith.subf %26, %28 : vector<16x128xf32>
      %30 = math.log %26 : vector<16x128xf32>
      %cst = arith.constant -1.000000e+02 : f32
      %31 = vector.broadcast %cst : f32 to vector<16x128xf32>
      %32 = arith.maximumf %30, %31 : vector<16x128xf32>
      %cst_13 = arith.constant 1.000000e+00 : f32
      %33 = vector.broadcast %cst_13 : f32 to vector<16x128xf32>
      %34 = arith.subf %33, %26 : vector<16x128xf32>
      %35 = math.log %34 : vector<16x128xf32>
      %cst_14 = arith.constant -1.000000e+02 : f32
      %36 = vector.broadcast %cst_14 : f32 to vector<16x128xf32>
      %37 = arith.maximumf %35, %36 : vector<16x128xf32>
      %38 = arith.mulf %28, %32 : vector<16x128xf32>
      %cst_15 = arith.constant 1.000000e+00 : f32
      %39 = vector.broadcast %cst_15 : f32 to vector<16x128xf32>
      %40 = arith.subf %39, %28 : vector<16x128xf32>
      %41 = arith.mulf %40, %37 : vector<16x128xf32>
      %42 = arith.addf %38, %41 : vector<16x128xf32>
      %43 = arith.mulf %29, %29 : vector<16x128xf32>
      %c16_i32_16 = arith.constant 16 : i32
      %44 = arith.muli %c0_i32_9, %c16_i32_16 : i32
      %45 = arith.subi %10, %44 : i32
      %46 = vector.broadcast %45 : i32 to vector<16x128xi32>
      %47 = arith.cmpi slt, %22, %46 : vector<16x128xi32>
      %c0_17 = arith.constant 0 : index
      %c0_18 = arith.constant 0 : index
      %48 = vector.load %arg7[%c0_17, %c0_18] : memref<16x128xf32, #tpu.memory_space<vmem>>, vector<16x128xf32>
      %cst_19 = arith.constant 0.000000e+00 : f32
      %49 = vector.broadcast %cst_19 : f32 to vector<16x128xf32>
      %50 = arith.select %47, %43, %49 : vector<16x128xi1>, vector<16x128xf32>
      %51 = arith.addf %48, %50 : vector<16x128xf32>
      %c0_20 = arith.constant 0 : index
      %c0_21 = arith.constant 0 : index
      %52 = vector.load %arg7[%c0_20, %c0_21] : memref<16x128xf32, #tpu.memory_space<vmem>>, vector<16x128xf32>
      tpu.vector_store %arg7[%c0_20, %c0_21], %51 {strides = array<i32>} : memref<16x128xf32, #tpu.memory_space<vmem>>, vector<16x128xf32>,
      %c0_22 = arith.constant 0 : index
      %c0_23 = arith.constant 0 : index
      %53 = vector.load %arg8[%c0_22, %c0_23] : memref<16x128xf32, #tpu.memory_space<vmem>>, vector<16x128xf32>
      %cst_24 = arith.constant 0.000000e+00 : f32
      %54 = vector.broadcast %cst_24 : f32 to vector<16x128xf32>
      %55 = arith.select %47, %42, %54 : vector<16x128xi1>, vector<16x128xf32>
      %56 = arith.addf %53, %55 : vector<16x128xf32>
      %c0_25 = arith.constant 0 : index
      %c0_26 = arith.constant 0 : index
      %57 = vector.load %arg8[%c0_25, %c0_26] : memref<16x128xf32, #tpu.memory_space<vmem>>, vector<16x128xf32>
      tpu.vector_store %arg8[%c0_25, %c0_26], %56 {strides = array<i32>} : memref<16x128xf32, #tpu.memory_space<vmem>>, vector<16x128xf32>,
      %c1_i32_27 = arith.constant 1 : i32
    } else {
    }
    %c0_i32_7 = arith.constant 0 : i32
    %19 = arith.cmpi eq, %arg1, %c0_i32_7 : i32
    %20 = arith.extui %19 : i1 to i32
    %c0_i32_8 = arith.constant 0 : i32
    %21 = arith.cmpi ne, %20, %c0_i32_8 : i32
    scf.if %21 {
      %c0_9 = arith.constant 0 : index
      %c0_10 = arith.constant 0 : index
      %22 = vector.load %arg7[%c0_9, %c0_10] : memref<16x128xf32, #tpu.memory_space<vmem>>, vector<16x128xf32>
      %23 = vector.shape_cast %22 : vector<16x128xf32> to vector<1x16x128xf32>
      %cst = arith.constant dense<0.000000e+00> : vector<1xf32>
      %24 = vector.multi_reduction <add>, %23, %cst [1, 2] : vector<1x16x128xf32> to vector<1xf32>
      %25 = vector.shape_cast %24 : vector<1xf32> to vector<1x1x1xf32>
      %26 = vector.extract %25[0, 0, 0] : f32 from vector<1x1x1xf32>
      %c0_11 = arith.constant 0 : index
      %c0_12 = arith.constant 0 : index
      %27 = vector.load %arg8[%c0_11, %c0_12] : memref<16x128xf32, #tpu.memory_space<vmem>>, vector<16x128xf32>
      %28 = vector.shape_cast %27 : vector<16x128xf32> to vector<1x16x128xf32>
      %cst_13 = arith.constant dense<0.000000e+00> : vector<1xf32>
      %29 = vector.multi_reduction <add>, %28, %cst_13 [1, 2] : vector<1x16x128xf32> to vector<1xf32>
      %30 = vector.shape_cast %29 : vector<1xf32> to vector<1x1x1xf32>
      %31 = vector.extract %30[0, 0, 0] : f32 from vector<1x1x1xf32>
      %c0_14 = arith.constant 0 : index
      %32 = memref.load %arg2[%c0_14] : memref<2xf32, #tpu.memory_space<smem>>
      %33 = arith.mulf %32, %26 : f32
      %c1_15 = arith.constant 1 : index
      %34 = memref.load %arg2[%c1_15] : memref<2xf32, #tpu.memory_space<smem>>
      %35 = arith.mulf %34, %31 : f32
      %36 = arith.addf %33, %35 : f32
      %37 = vector.broadcast %36 : f32 to vector<1x1x1xf32>
      %c0_16 = arith.constant 0 : index
      %c0_17 = arith.constant 0 : index
      %c0_18 = arith.constant 0 : index
      %38 = vector.load %arg6[%c0_16, %c0_17, %c0_18] : memref<1x1x1xf32, #tpu.memory_space<vmem>>, vector<1x1x1xf32>
      tpu.vector_store %arg6[%c0_16, %c0_17, %c0_18], %37 {strides = array<i32>} : memref<1x1x1xf32, #tpu.memory_space<vmem>>, vector<1x1x1xf32>,
    } else {
    }
    return
  }
  func.func @transform_0(%arg0: i32, %arg1: i32) -> i32 {
    %c0_i32 = arith.constant 0 : i32
    %c0_i32_0 = arith.constant 0 : i32
    return %c0_i32 : i32
  }
  func.func @transform_1(%arg0: i32, %arg1: i32) -> i32 {
    %c0_i32 = arith.constant 0 : i32
    %c0_i32_0 = arith.constant 0 : i32
    return %c0_i32 : i32
  }
  func.func @transform_2(%arg0: i32, %arg1: i32) -> (i32, i32) {
    %c1_i32 = arith.constant 1 : i32
    %0 = arith.muli %arg0, %c1_i32 : i32
    %1 = arith.addi %0, %arg1 : i32
    %c0_i32 = arith.constant 0 : i32
    %2 = arith.minsi %1, %c0_i32 : i32
    %c0_i32_0 = arith.constant 0 : i32
    %c0_i32_1 = arith.constant 0 : i32
    return %2, %c0_i32_0 : i32, i32
  }
  func.func @transform_3(%arg0: i32, %arg1: i32) -> (i32, i32) {
    %c1_i32 = arith.constant 1 : i32
    %0 = arith.muli %arg0, %c1_i32 : i32
    %1 = arith.addi %0, %arg1 : i32
    %c0_i32 = arith.constant 0 : i32
    %2 = arith.minsi %1, %c0_i32 : i32
    %c0_i32_0 = arith.constant 0 : i32
    %c0_i32_1 = arith.constant 0 : i32
    return %2, %c0_i32_0 : i32, i32
  }
  func.func @transform_4(%arg0: i32, %arg1: i32) -> (i32, i32, i32) {
    %c0_i32 = arith.constant 0 : i32
    %c0_i32_0 = arith.constant 0 : i32
    %c0_i32_1 = arith.constant 0 : i32
    return %arg0, %c0_i32, %c0_i32_0 : i32, i32, i32
  }
}

</mosaic_0001>

<llo_original>
// kernel: tpu_custom_call.1
$region0: #{tpu_custom_call.1}
  #allocation0 [shape = 'u32[]', space=smem, size = 0x4, offset = 0x4, fixed_abs, tag = 'smem constant byte address 0x4 - core index']
  #allocation1 [shape = 'u32[72,128]{1,0:T(1,128)}', space=vmem, size = 0x9000, scoped, tag = 'internal scratch']
  #allocation2 [shape = 'f32[16,128]{1,0:T(8,128)}', space=vmem, size = 0x2000, scoped, tag = 'scratch operand']
  #allocation3 [shape = 'f32[16,128]{1,0:T(8,128)}', space=vmem, size = 0x2000, scoped, tag = 'scratch operand']
  %s0 = inlined_call_operand.hbm [shape: f32[2], index: 0, kind: input, shape index: {}]
  %s1 = inlined_call_operand.hbm [shape: s32[2], index: 1, kind: input, shape index: {}]
  %s2 = inlined_call_operand.hbm [shape: f32[16,128], index: 2, kind: input, shape index: {}]
  %s3 = inlined_call_operand.hbm [shape: f32[16,128], index: 3, kind: input, shape index: {}]
  %s4 = inlined_call_operand.hbm [shape: f32[1,1,1], index: 4, kind: output, shape index: {}]
  %s5 = sld [smem:[#allocation0]]
  $region58: #{tpu_custom_call.1} parent=0
    _
  %s7 = ssub.s32 1, %s5
  %s8 = scalar_select 0, %s7, %s5
  $region1: #{tpu_custom_call.1} parent=0
    #allocation4 [shape = 'u8[512]{0}', space=smem, size = 0x200, scoped, tag = 'input window, operand 0, single buffered']
    #allocation5 [shape = 's32[1]{0}', space=sflag, size = 0x4, scoped, tag = 'scoped memory for tpu_custom_call.1']
    #allocation6 [shape = 's32[1]{0}', space=sflag, size = 0x4, scoped, tag = 'scoped memory for tpu_custom_call.1']
    #allocation7 [shape = 's32[1]{0}', space=sflag, size = 0x4, scoped, tag = 'scoped memory for tpu_custom_call.1']
    #allocation8 [shape = 'u8[512]{0}', space=smem, size = 0x200, scoped, tag = 'input window, operand 1, single buffered']
    #allocation9 [shape = 's32[1]{0}', space=sflag, size = 0x4, scoped, tag = 'scoped memory for tpu_custom_call.1']
    #allocation10 [shape = 'u8[8192]{0}', space=vmem, size = 0x2000, scoped, tag = 'input window, operand 2, single buffered']
    #allocation11 [shape = 'u8[8192]{0}', space=vmem, size = 0x2000, scoped, tag = 'input window, operand 3, single buffered']
    #allocation12 [shape = 's32[1]{0}', space=sflag, size = 0x4, scoped, tag = 'scoped memory for tpu_custom_call.1']
    #allocation13 [shape = 'u8[512]{0}', space=vmem, size = 0x400, scoped, tag = 'output window, operand 0, single buffered']
    %9 = vsyncpa [#allocation7], 0
    %10 = vsyncpa [#allocation9], 0
    %11 = vsyncpa [#allocation5], 0
    %12 = vsyncpa [#allocation12], 0
    %13 = vsyncpa [#allocation6], 0
    // Predicated region
    $region2: #{tpu_custom_call.1} parent=1 // pred_check
      _
    $region3: #{tpu_custom_call.1} parent=1 // pred_check_branch
      %15 = sbr.rel (0) target = $region5
    $region4: #{tpu_custom_call.1} parent=1 // pred_region
      %17 = vsyncadd [#allocation7], 0
      %s19 = sshll.u32 %s0, 4
      %s20 = int_to_ptr.hbm [resolvable:$true] %s19
      %22 = dma.hbm_to_smem %s20, 16, [#allocation4], [#allocation7]
    $region5: #{tpu_custom_call.1} parent=1 // pred_fallthru
      _
    // Predicated region
    $region6: #{tpu_custom_call.1} parent=1 // pred_check
      _
    $region7: #{tpu_custom_call.1} parent=1 // pred_check_branch
      %24 = sbr.rel (0) target = $region9
    $region8: #{tpu_custom_call.1} parent=1 // pred_region
      %26 = vsyncadd [#allocation9], 0
      %s28 = sshll.u32 %s1, 4
      %s29 = int_to_ptr.hbm [resolvable:$true] %s28
      %31 = dma.hbm_to_smem %s29, 16, [#allocation8], [#allocation9]
    $region9: #{tpu_custom_call.1} parent=1 // pred_fallthru
      _
    // Predicated region
    $region10: #{tpu_custom_call.1} parent=1 // pred_check
      _
    $region11: #{tpu_custom_call.1} parent=1 // pred_check_branch
      %33 = sbr.rel (0) target = $region13
    $region12: #{tpu_custom_call.1} parent=1 // pred_region
      %s34 = sadd.s32 0, 0
      %p35 = scmp.lt.s32.totalorder %s34, 0
      %s36 = scalar_select %p35, %s34, 0
      %s37 = smul.u32 2, %s36
      %39 = vsyncadd [#allocation5], 0
      %s40 = smul.addr %s37, 8
      %s41 = scalar_lea.hbm %s2, %s40
      %s42 = sshll.u32 %s41, 4
      %s43 = int_to_ptr.hbm [resolvable:$true] %s42
      %s44 = sshll.u32 [#allocation10], 4
      %s45 = int_to_ptr.vmem [resolvable:$true] %s44
      %50 = dma.hbm_to_vmem [thread:$0]  %s43, 256, %s45, [#allocation5], 128, 128, 8
    $region13: #{tpu_custom_call.1} parent=1 // pred_fallthru
      _
    // Predicated region
    $region14: #{tpu_custom_call.1} parent=1 // pred_check
      _
    $region15: #{tpu_custom_call.1} parent=1 // pred_check_branch
      %52 = sbr.rel (0) target = $region17
    $region16: #{tpu_custom_call.1} parent=1 // pred_region
      %s53 = sadd.s32 0, 0
      %p54 = scmp.lt.s32.totalorder %s53, 0
      %s55 = scalar_select %p54, %s53, 0
      %s56 = smul.u32 2, %s55
      %58 = vsyncadd [#allocation12], 0
      %s59 = smul.addr %s56, 8
      %s60 = scalar_lea.hbm %s3, %s59
      %s61 = sshll.u32 %s60, 4
      %s62 = int_to_ptr.hbm [resolvable:$true] %s61
      %s63 = sshll.u32 [#allocation11], 4
      %s64 = int_to_ptr.vmem [resolvable:$true] %s63
      %69 = dma.hbm_to_vmem [thread:$0]  %s62, 256, %s64, [#allocation12], 128, 128, 8
    $region17: #{tpu_custom_call.1} parent=1 // pred_fallthru
      _
    // Predicated region
    $region18: #{tpu_custom_call.1} parent=1 // pred_check
      _
    $region19: #{tpu_custom_call.1} parent=1 // pred_check_branch
      %71 = sbr.rel (0) target = $region21
    $region20: #{tpu_custom_call.1} parent=1 // pred_region
      %73 = dma.done [#allocation7], 16
    $region21: #{tpu_custom_call.1} parent=1 // pred_fallthru
      _
    // Predicated region
    $region22: #{tpu_custom_call.1} parent=1 // pred_check
      _
    $region23: #{tpu_custom_call.1} parent=1 // pred_check_branch
      %75 = sbr.rel (0) target = $region25
    $region24: #{tpu_custom_call.1} parent=1 // pred_region
      %77 = dma.done [#allocation9], 16
    $region25: #{tpu_custom_call.1} parent=1 // pred_fallthru
      _
    // Predicated region
    $region26: #{tpu_custom_call.1} parent=1 // pred_check
      _
    $region27: #{tpu_custom_call.1} parent=1 // pred_check_branch
      %79 = sbr.rel (0) target = $region29
    $region28: #{tpu_custom_call.1} parent=1 // pred_region
      %81 = dma.done [#allocation5], 256
    $region29: #{tpu_custom_call.1} parent=1 // pred_fallthru
      _
    // Predicated region
    $region30: #{tpu_custom_call.1} parent=1 // pred_check
      _
    $region31: #{tpu_custom_call.1} parent=1 // pred_check_branch
      %83 = sbr.rel (0) target = $region33
    $region32: #{tpu_custom_call.1} parent=1 // pred_region
      %85 = dma.done [#allocation12], 256
    $region33: #{tpu_custom_call.1} parent=1 // pred_fallthru
      _
    %86 = sfence
    %s87 = sadd.s32 0, 0
    %p88 = scmp.lt.s32.totalorder %s87, 0
    %s89 = scalar_select %p88, %s87, 0
    %s90 = smul.u32 2, %s89
    %s91 = sadd.s32 0, 0
    %p92 = scmp.lt.s32.totalorder %s91, 0
    %s93 = scalar_select %p92, %s91, 0
    %s94 = smul.u32 2, %s93
    %p95 = scmp.eq.s32.totalorder 0, 0
    // Predicated region
    $region34: #{tpu_custom_call.1} parent=1 // pred_check
      %p96 = pneg %p95
    $region35: #{tpu_custom_call.1} parent=1 // pred_check_branch
      %98 = sbr.rel (%p96) target = $region37
    $region36: #{tpu_custom_call.1} parent=1 // pred_region
      %99 = vst [vmem:[#allocation2] sm:$0xff] 0.0
      %100 = vst [vmem:[#allocation2 + $0x8] sm:$0xff] 0.0
      %101 = vst [vmem:[#allocation3] sm:$0xff] 0.0
      %102 = vst [vmem:[#allocation3 + $0x8] sm:$0xff] 0.0
    $region37: #{tpu_custom_call.1} parent=1 // pred_fallthru
      _
    %s103 = sadd.s32 0, 0
    %s104 = sld [smem:[#allocation8]]
    %s105 = sld [smem:[#allocation8 + $0x1]]
    %p106 = scmp.lt.s32.totalorder %s103, %s104
    %p107 = scmp.eq.s32.totalorder %s103, %s104
    %s108 = scalar_select %p107, %s105, 0
    %s109 = scalar_select %p106, 16, %s108
    %p110 = scmp.eq.s32.totalorder %s109, 16
    // Predicated region
    $region38: #{tpu_custom_call.1} parent=1 // pred_check
      %p111 = pneg %p110
    $region39: #{tpu_custom_call.1} parent=1 // pred_check_branch
      %113 = sbr.rel (%p111) target = $region41
    $region40: #{tpu_custom_call.1} parent=1 // pred_region
      %v114 = vld [vmem:[#allocation10] sm:$0xff]
      %v115 = vld [vmem:[#allocation10 + $0x8] sm:$0xff]
      %v116 = vld [vmem:[#allocation11] sm:$0xff]
      %v117 = vld [vmem:[#allocation11 + $0x8] sm:$0xff]
      %v118 = vsub.f32 %v114, %v116
      %v119 = vsub.f32 %v115, %v117
      %v120 = vlog2.pop %v114
      %v121 = vmul.f32 %v120, 0.6931472
      %v122 = vlog2.pop %v115
      %v123 = vmul.f32 %v122, 0.6931472
      %v124 = vmax.f32 %v121, -100.0
      %v125 = vmax.f32 %v123, -100.0
      %v126 = vsub.f32 1.0, %v114
      %v127 = vsub.f32 1.0, %v115
      %v128 = vlog2.pop %v126
      %v129 = vmul.f32 %v128, 0.6931472
      %v130 = vlog2.pop %v127
      %v131 = vmul.f32 %v130, 0.6931472
      %v132 = vmax.f32 %v129, -100.0
      %v133 = vmax.f32 %v131, -100.0
      %v134 = vmul.f32 %v116, %v124
      %v135 = vmul.f32 %v117, %v125
      %v136 = vsub.f32 1.0, %v116
      %v137 = vsub.f32 1.0, %v117
      %v138 = vmul.f32 %v136, %v132
      %v139 = vmul.f32 %v137, %v133
      %v140 = vadd.f32 %v134, %v138
      %v141 = vadd.f32 %v135, %v139
      %v142 = vmul.f32 %v118, %v118
      %v143 = vmul.f32 %v119, %v119
      %v144 = vld [vmem:[#allocation2] sm:$0xff]
      %v145 = vld [vmem:[#allocation2 + $0x8] sm:$0xff]
      %v146 = vadd.f32 %v144, %v142
      %v147 = vadd.f32 %v145, %v143
      %148 = vst [vmem:[#allocation2] sm:$0xff] %v146
      %149 = vst [vmem:[#allocation2 + $0x8] sm:$0xff] %v147
      %v150 = vld [vmem:[#allocation3] sm:$0xff]
      %v151 = vld [vmem:[#allocation3 + $0x8] sm:$0xff]
      %v152 = vadd.f32 %v150, %v140
      %v153 = vadd.f32 %v151, %v141
      %154 = vst [vmem:[#allocation3] sm:$0xff] %v152
      %155 = vst [vmem:[#allocation3 + $0x8] sm:$0xff] %v153
    $region41: #{tpu_custom_call.1} parent=1 // pred_fallthru
      _
    %p156 = scmp.gt.s32.totalorder %s109, 0
    %p157 = scmp.lt.s32.totalorder %s109, 16
    %p158 = pnand %p156, %p157
    %p159 = pneg %p158
    // Predicated region
    $region42: #{tpu_custom_call.1} parent=1 // pred_check
      _
    $region43: #{tpu_custom_call.1} parent=1 // pred_check_branch
      %161 = sbr.rel (%p158) target = $region45
    $region44: #{tpu_custom_call.1} parent=1 // pred_region
      %v162 = vlaneseq
      %v163 = vshrl.u32 %v162, 7
      %v164 = vadd.s32 %v163, 8
      %v165 = vld [vmem:[#allocation10] sm:$0xff]
      %v166 = vld [vmem:[#allocation10 + $0x8] sm:$0xff]
      %v167 = vld [vmem:[#allocation11] sm:$0xff]
      %v168 = vld [vmem:[#allocation11 + $0x8] sm:$0xff]
      %v169 = vsub.f32 %v165, %v167
      %v170 = vsub.f32 %v166, %v168
      %v171 = vlog2.pop %v165
      %v172 = vmul.f32 %v171, 0.6931472
      %v173 = vlog2.pop %v166
      %v174 = vmul.f32 %v173, 0.6931472
      %v175 = vmax.f32 %v172, -100.0
      %v176 = vmax.f32 %v174, -100.0
      %v177 = vsub.f32 1.0, %v165
      %v178 = vsub.f32 1.0, %v166
      %v179 = vlog2.pop %v177
      %v180 = vmul.f32 %v179, 0.6931472
      %v181 = vlog2.pop %v178
      %v182 = vmul.f32 %v181, 0.6931472
      %v183 = vmax.f32 %v180, -100.0
      %v184 = vmax.f32 %v182, -100.0
      %v185 = vmul.f32 %v167, %v175
      %v186 = vmul.f32 %v168, %v176
      %v187 = vsub.f32 1.0, %v167
      %v188 = vsub.f32 1.0, %v168
      %v189 = vmul.f32 %v187, %v183
      %v190 = vmul.f32 %v188, %v184
      %v191 = vadd.f32 %v185, %v189
      %v192 = vadd.f32 %v186, %v190
      %v193 = vmul.f32 %v169, %v169
      %v194 = vmul.f32 %v170, %v170
      %v195 = vstv %s109
      %vm196 = vcmp.lt.s32.totalorder %v163, %v195
      %vm197 = vcmp.lt.s32.totalorder %v164, %v195
      %v198 = vld [vmem:[#allocation2] sm:$0xff]
      %v199 = vld [vmem:[#allocation2 + $0x8] sm:$0xff]
      %v200 = vsel %vm196, %v193, 0.0
      %v201 = vsel %vm197, %v194, 0.0
      %v202 = vadd.f32 %v198, %v200
      %v203 = vadd.f32 %v199, %v201
      %204 = vst [vmem:[#allocation2] sm:$0xff] %v202
      %205 = vst [vmem:[#allocation2 + $0x8] sm:$0xff] %v203
      %v206 = vld [vmem:[#allocation3] sm:$0xff]
      %v207 = vld [vmem:[#allocation3 + $0x8] sm:$0xff]
      %v208 = vsel %vm196, %v191, 0.0
      %v209 = vsel %vm197, %v192, 0.0
      %v210 = vadd.f32 %v206, %v208
      %v211 = vadd.f32 %v207, %v209
      %212 = vst [vmem:[#allocation3] sm:$0xff] %v210
      %213 = vst [vmem:[#allocation3 + $0x8] sm:$0xff] %v211
    $region45: #{tpu_custom_call.1} parent=1 // pred_fallthru
      _
    // Predicated region
    $region46: #{tpu_custom_call.1} parent=1 // pred_check
      %p214 = pneg %p95
    $region47: #{tpu_custom_call.1} parent=1 // pred_check_branch
      %216 = sbr.rel (%p214) target = $region49
    $region48: #{tpu_custom_call.1} parent=1 // pred_region
      %v217 = vld [vmem:[#allocation2] sm:$0xff]
      %v218 = vld [vmem:[#allocation2 + $0x8] sm:$0xff]
      %v219 = vadd.f32 %v217, %v218
      %220 = vadd.xlane.f32.xlu0 %v219
      %v221 = vpop.xlane.xlu0 %220
      %v222 = vrot.slane %v221, 4
      %v223 = vadd.f32 %v221, %v222
      %v224 = vrot.slane %v223, 2
      %v225 = vadd.f32 %v223, %v224
      %v226 = vrot.slane %v225, 1
      %v227 = vadd.f32 %v225, %v226
      %s228 = vtos %v227
      %v229 = vld [vmem:[#allocation3] sm:$0xff]
      %v230 = vld [vmem:[#allocation3 + $0x8] sm:$0xff]
      %v231 = vadd.f32 %v229, %v230
      %232 = vadd.xlane.f32.xlu0 %v231
      %v233 = vpop.xlane.xlu0 %232
      %v234 = vrot.slane %v233, 4
      %v235 = vadd.f32 %v233, %v234
      %v236 = vrot.slane %v235, 2
      %v237 = vadd.f32 %v235, %v236
      %v238 = vrot.slane %v237, 1
      %v239 = vadd.f32 %v237, %v238
      %s240 = vtos %v239
      %s241 = sld [smem:[#allocation4]]
      %s242 = smul.f32 %s241, %s228
      %s243 = sld [smem:[#allocation4 + $0x1]]
      %s244 = smul.f32 %s243, %s240
      %s245 = sadd.f32 %s242, %s244
      %v246 = vstv %s245
      %vm247 = vcmask 0
      %248 = vst.msk [vmem:[#allocation13] sm:$0x1] %vm247, %v246
    $region49: #{tpu_custom_call.1} parent=1 // pred_fallthru
      _
    // Predicated region
    $region50: #{tpu_custom_call.1} parent=1 // pred_check
      _
    $region51: #{tpu_custom_call.1} parent=1 // pred_check_branch
      %250 = sbr.rel (0) target = $region53
    $region52: #{tpu_custom_call.1} parent=1 // pred_region
      %252 = vsyncadd [#allocation6], 0
      %s254 = sshll.u32 [#allocation13], 4
      %s255 = int_to_ptr.vmem [resolvable:$true] %s254
      %s256 = sshll.u32 %s4, 4
      %s257 = int_to_ptr.hbm [resolvable:$true] %s256
      %259 = dma.vmem_to_hbm [thread:$0]  %s255, 16, %s257, [#allocation6]
    $region53: #{tpu_custom_call.1} parent=1 // pred_fallthru
      _
    // Predicated region
    $region54: #{tpu_custom_call.1} parent=1 // pred_check
      _
    $region55: #{tpu_custom_call.1} parent=1 // pred_check_branch
      %261 = sbr.rel (0) target = $region57
    $region56: #{tpu_custom_call.1} parent=1 // pred_region
      %263 = dma.done [#allocation6], 16
    $region57: #{tpu_custom_call.1} parent=1 // pred_fallthru
      _
    %264 = vsyncpa [#allocation5], 1
    %265 = vsyncpa [#allocation12], 1
    %266 = vsyncpa [#allocation6], 1
    %267 = vsyncpa [#allocation7], 1
    %268 = vsyncpa [#allocation9], 1

</llo_original>
